<compile_context>
chip_gen: v5e
topology: v5e:2x2
jax: 0.10.0
libtpu: 0.0.40
codegen_flags: <defaults>
</compile_context>

<pallas_src>
import functools

import jax
import jax.numpy as jnp
from jax.experimental import pallas as pl
from jax.experimental.pallas import tpu as pltpu


def _conv3x3_relu_kernel(x_ref, w_ref, b_ref, o_ref, xz_ref, patch_ref, *, H, W):
    """One grid step = one image.

    x_ref:     (1, Cin, H*W)          flattened NCHW image (VMEM)
    w_ref:     (Cout, 9*Cin)          fused 3x3 taps, row index (kh*3+kw)*Cin+ci
    b_ref:     (Cout, 1)              bias
    o_ref:     (1, Cout, H*W)         flattened NCHW output
    xz_ref:    (Cin, H*W + 2W + 2)    scratch: image with flat zero halo
    patch_ref: (9*Cin, H*W)           scratch: im2col patch (matmul K x N)
    """
    Cin = x_ref.shape[1]
    HW = H * W
    PAD = W + 1                         # halo length on each side

    # In-kernel padding=1: refresh the zero halos (two tiny (Cin, W+1) stores)
    # and drop the image in the middle.  Refreshing every step keeps the
    # kernel independent of scratch persistence / core sharding.
    xz_ref[:, 0:PAD] = jnp.zeros((Cin, PAD), jnp.float32)
    xz_ref[:, PAD + HW:PAD + HW + PAD] = jnp.zeros((Cin, PAD), jnp.float32)
    xz_ref[:, PAD:PAD + HW] = x_ref[0]

    # W-boundary masks (hoisted; the flat halo already handles the H borders
    # and the flat out-of-range positions).
    lane = jax.lax.broadcasted_iota(jnp.int32, (Cin, HW), 1)
    if W & (W - 1) == 0:
        w_id = lane & (W - 1)
    else:
        w_id = lane % W  # TODO(synk): verify vector remainder lowering for non-pow2 W
    not_first_col = w_id != 0           # invalid lanes when reading column w-1
    not_last_col = w_id != (W - 1)      # invalid lanes when reading column w+1

    # im2col: 9 full-width (H*W-lane) loads from the haloed image at static
    # offsets, masked at the W boundary in registers, stored side-by-side
    # along the patch's K (sublane) axis.  Every patch element is rewritten
    # every step, so no memset of the patch is ever needed.
    for kh in range(3):
        for kw in range(3):
            t = kh * 3 + kw
            d = (kh - 1) * W + (kw - 1)
            v = xz_ref[:, PAD + d:PAD + d + HW]          # (Cin, HW)
            if kw == 0:
                v = jnp.where(not_first_col, v, 0.0)
            elif kw == 2:
                v = jnp.where(not_last_col, v, 0.0)
            patch_ref[t * Cin:(t + 1) * Cin, :] = v

    # Single fused MXU matmul: (Cout, 9*Cin) x (9*Cin, H*W) -> (Cout, H*W),
    # then bias + ReLU on the VPU and a lane-dense (256-wide) store.
    acc = jnp.dot(w_ref[...], patch_ref[...], preferred_element_type=jnp.float32)
    acc = jnp.maximum(acc + b_ref[...], 0.0)
    o_ref[0] = acc.astype(o_ref.dtype)


def single_conv_pallas(x_nchw, weight, bias):
    """x_nchw: (N, Cin, H, W); weight: (Cout, Cin, 3, 3); bias: (Cout,).
    Returns (N, Cout, H, W), matching nn.Conv2d(in, out, 3, padding=1) + ReLU."""
    N, Cin, H, W = x_nchw.shape
    Cout = weight.shape[0]
    HW = H * W
    L = HW + 2 * (W + 1)

    # Wrapper glue is free reshapes only (H*W is contiguous in NCHW); the 3x3
    # weight reformat touches just 9*Cin*Cout elements.
    x_flat = x_nchw.reshape(N, Cin, HW)
    # weight (Cout,Cin,3,3) -> (Cout, 9*Cin): column index = (kh*3+kw)*Cin + ci
    w_fused = jnp.transpose(weight, (0, 2, 3, 1)).reshape(Cout, 9 * Cin)
    b_col = bias.reshape(Cout, 1)

    # VMEM budget with sublane/lane padding and 2x double-buffered in/out
    # blocks; grid-invariant weight/bias counted double-buffered as well.
    def _padded_bytes(rows, cols):
        return (-(-rows // 8) * 8) * (-(-cols // 128) * 128) * 4

    vmem_needed = (
        2 * _padded_bytes(Cin, HW)            # x block
        + 2 * _padded_bytes(Cout, HW)         # out block
        + 2 * _padded_bytes(Cout, 9 * Cin)    # fused weights
        + 2 * _padded_bytes(Cout, 1)          # bias
        + _padded_bytes(Cin, L)               # halo scratch (single buffered)
        + _padded_bytes(9 * Cin, HW)          # im2col patch scratch
    )
    vmem_limit = int(min(max(4 * vmem_needed, 4 << 20), 32 << 20))

    kernel = functools.partial(_conv3x3_relu_kernel, H=H, W=W)

    out_flat = pl.pallas_call(
        kernel,
        out_shape=jax.ShapeDtypeStruct((N, Cout, HW), x_nchw.dtype),
        grid_spec=pltpu.PrefetchScalarGridSpec(
            num_scalar_prefetch=0,
            # One image per step: >= 2 steps (even) so both v7x TensorCores get
            # work and the auto-pipeline overlaps HBM DMA with im2col+matmul.
            grid=(N,),
            in_specs=[
                pl.BlockSpec((1, Cin, HW), lambda n: (n, 0, 0)),
                pl.BlockSpec((Cout, 9 * Cin), lambda n: (0, 0)),
                pl.BlockSpec((Cout, 1), lambda n: (0, 0)),
            ],
            out_specs=pl.BlockSpec((1, Cout, HW), lambda n: (n, 0, 0)),
            scratch_shapes=[
                pltpu.VMEM((Cin, L), jnp.float32),          # flat-halo image
                pltpu.VMEM((9 * Cin, HW), jnp.float32),     # im2col patch
            ],
        ),
        compiler_params=pltpu.CompilerParams(
            dimension_semantics=("parallel",),
            vmem_limit_bytes=vmem_limit,
        ),
    )(x_flat, w_fused, b_col)

    # TODO(synk): for very large H*W (or N == 1) add H-row tiling with a 2-row
    # halo so the patch scratch stays small and the grid keeps >= 2 steps; at
    # 16x16 a whole image per step is the right granularity.
    return out_flat.reshape(N, Cout, H, W)


if __name__ == "__main__":
    # single_conv(in_ch=4, out_ch=8, bn=False)
    N, Cin, H, W = 2, 4, 16, 16
    Cout = 8

    key = jax.random.PRNGKey(0)
    kx, kwt, kb = jax.random.split(key, 3)
    x = jax.random.normal(kx, (N, Cin, H, W), dtype=jnp.float32)
    # Deterministic synthetic parameters (PyTorch-style uniform bound for Conv2d).
    fan_in = Cin * 3 * 3
    bound = 1.0 / (fan_in ** 0.5)
    weight = jax.random.uniform(kwt, (Cout, Cin, 3, 3), jnp.float32, -bound, bound)
    bias = jax.random.uniform(kb, (Cout,), jnp.float32, -bound, bound)

    out = single_conv_pallas(x, weight, bias)
    jax.block_until_ready(out)

    # Cross-check against pure-JAX reference (same semantics as nn.Conv2d+ReLU).
    ref = jax.lax.conv_general_dilated(
        x, weight, window_strides=(1, 1), padding="SAME",
        dimension_numbers=("NCHW", "OIHW", "NCHW"),
    ) + bias[None, :, None, None]
    ref = jnp.maximum(ref, 0.0)
    assert out.shape == (N, Cout, H, W)
    assert jnp.allclose(out, ref, atol=1e-5, rtol=1e-5), "mismatch vs reference"

    print("KERNEL_OK")
</pallas_src>

<mosaic_0001>
module attributes {stable_mosaic.version = 11 : i64} {
  func.func @_conv3x3_relu_kernel(%arg0: i32, %arg1: memref<1x4x256xf32, #tpu.memory_space<vmem>>, %arg2: memref<8x36xf32, #tpu.memory_space<vmem>>, %arg3: memref<8x1xf32, #tpu.memory_space<vmem>>, %arg4: memref<1x8x256xf32, #tpu.memory_space<vmem>>, %arg5: memref<4x290xf32, #tpu.memory_space<vmem>>, %arg6: memref<36x256xf32, #tpu.memory_space<vmem>>) attributes {dimension_semantics = [#tpu.dimension_semantics<parallel>], iteration_bounds = array<i64: 2>, scalar_prefetch = 0 : i64, scratch_operands = 2 : i64, tpu.core_type = #tpu.core_type<tc>, window_params = [{transform_indices = @transform_0, window_bounds = array<i64: 1, 4, 256>}, {pipeline_mode = #tpu.pipeline_mode<synchronous>, transform_indices = @transform_1, window_bounds = array<i64: 8, 36>}, {pipeline_mode = #tpu.pipeline_mode<synchronous>, transform_indices = @transform_2, window_bounds = array<i64: 8, 1>}, {transform_indices = @transform_3, window_bounds = array<i64: 1, 8, 256>}]} {
    %cst = arith.constant 0.000000e+00 : f32
    %0 = vector.broadcast %cst : f32 to vector<4x17xf32>
    %c0 = arith.constant 0 : index
    %c0_0 = arith.constant 0 : index
    %1 = vector.load %arg5[%c0, %c0_0] : memref<4x290xf32, #tpu.memory_space<vmem>>, vector<4x17xf32>
    tpu.vector_store %arg5[%c0, %c0_0], %0 {strides = array<i32>} : memref<4x290xf32, #tpu.memory_space<vmem>>, vector<4x17xf32>,
    %cst_1 = arith.constant 0.000000e+00 : f32
    %2 = vector.broadcast %cst_1 : f32 to vector<4x17xf32>
    %c0_2 = arith.constant 0 : index
    %c273 = arith.constant 273 : index
    %3 = vector.load %arg5[%c0_2, %c273] : memref<4x290xf32, #tpu.memory_space<vmem>>, vector<4x17xf32>
    tpu.vector_store %arg5[%c0_2, %c273], %2 {strides = array<i32>} : memref<4x290xf32, #tpu.memory_space<vmem>>, vector<4x17xf32>,
    %c0_3 = arith.constant 0 : index
    %c0_4 = arith.constant 0 : index
    %c0_5 = arith.constant 0 : index
    %4 = vector.load %arg1[%c0_3, %c0_4, %c0_5] : memref<1x4x256xf32, #tpu.memory_space<vmem>>, vector<1x4x256xf32>
    %5 = vector.shape_cast %4 : vector<1x4x256xf32> to vector<4x256xf32>
    %c0_6 = arith.constant 0 : index
    %c17 = arith.constant 17 : index
    %6 = vector.load %arg5[%c0_6, %c17] : memref<4x290xf32, #tpu.memory_space<vmem>>, vector<4x256xf32>
    tpu.vector_store %arg5[%c0_6, %c17], %5 {strides = array<i32>} : memref<4x290xf32, #tpu.memory_space<vmem>>, vector<4x256xf32>,
    %7 = tpu.iota {dimensions = array<i32: 1>} : vector<4x256xi32>
    %c15_i32 = arith.constant 15 : i32
    %8 = vector.broadcast %c15_i32 : i32 to vector<4x256xi32>
    %9 = arith.andi %7, %8 : vector<4x256xi32>
    %c0_i32 = arith.constant 0 : i32
    %10 = vector.broadcast %c0_i32 : i32 to vector<4x256xi32>
    %11 = arith.cmpi ne, %9, %10 : vector<4x256xi32>
    %c15_i32_7 = arith.constant 15 : i32
    %12 = vector.broadcast %c15_i32_7 : i32 to vector<4x256xi32>
    %13 = arith.cmpi ne, %9, %12 : vector<4x256xi32>
    %c0_8 = arith.constant 0 : index
    %c0_9 = arith.constant 0 : index
    %14 = vector.load %arg5[%c0_8, %c0_9] : memref<4x290xf32, #tpu.memory_space<vmem>>, vector<4x256xf32>
    %cst_10 = arith.constant 0.000000e+00 : f32
    %15 = vector.broadcast %cst_10 : f32 to vector<4x256xf32>
    %16 = arith.select %11, %14, %15 : vector<4x256xi1>, vector<4x256xf32>
    %c0_11 = arith.constant 0 : index
    %c0_12 = arith.constant 0 : index
    %17 = vector.load %arg6[%c0_11, %c0_12] : memref<36x256xf32, #tpu.memory_space<vmem>>, vector<4x256xf32>
    tpu.vector_store %arg6[%c0_11, %c0_12], %16 {strides = array<i32>} : memref<36x256xf32, #tpu.memory_space<vmem>>, vector<4x256xf32>,
    %c0_13 = arith.constant 0 : index
    %c1 = arith.constant 1 : index
    %18 = vector.load %arg5[%c0_13, %c1] : memref<4x290xf32, #tpu.memory_space<vmem>>, vector<4x256xf32>
    %c4 = arith.constant 4 : index
    %c0_14 = arith.constant 0 : index
    %19 = vector.load %arg6[%c4, %c0_14] : memref<36x256xf32, #tpu.memory_space<vmem>>, vector<4x256xf32>
    tpu.vector_store %arg6[%c4, %c0_14], %18 {strides = array<i32>} : memref<36x256xf32, #tpu.memory_space<vmem>>, vector<4x256xf32>,
    %c0_15 = arith.constant 0 : index
    %c2 = arith.constant 2 : index
    %20 = vector.load %arg5[%c0_15, %c2] : memref<4x290xf32, #tpu.memory_space<vmem>>, vector<4x256xf32>
    %cst_16 = arith.constant 0.000000e+00 : f32
    %21 = vector.broadcast %cst_16 : f32 to vector<4x256xf32>
    %22 = arith.select %13, %20, %21 : vector<4x256xi1>, vector<4x256xf32>
    %c8 = arith.constant 8 : index
    %c0_17 = arith.constant 0 : index
    %23 = vector.load %arg6[%c8, %c0_17] : memref<36x256xf32, #tpu.memory_space<vmem>>, vector<4x256xf32>
    tpu.vector_store %arg6[%c8, %c0_17], %22 {strides = array<i32>} : memref<36x256xf32, #tpu.memory_space<vmem>>, vector<4x256xf32>,
    %c0_18 = arith.constant 0 : index
    %c16 = arith.constant 16 : index
    %24 = vector.load %arg5[%c0_18, %c16] : memref<4x290xf32, #tpu.memory_space<vmem>>, vector<4x256xf32>
    %cst_19 = arith.constant 0.000000e+00 : f32
    %25 = vector.broadcast %cst_19 : f32 to vector<4x256xf32>
    %26 = arith.select %11, %24, %25 : vector<4x256xi1>, vector<4x256xf32>
    %c12 = arith.constant 12 : index
    %c0_20 = arith.constant 0 : index
    %27 = vector.load %arg6[%c12, %c0_20] : memref<36x256xf32, #tpu.memory_space<vmem>>, vector<4x256xf32>
    tpu.vector_store %arg6[%c12, %c0_20], %26 {strides = array<i32>} : memref<36x256xf32, #tpu.memory_space<vmem>>, vector<4x256xf32>,
    %c0_21 = arith.constant 0 : index
    %c17_22 = arith.constant 17 : index
    %28 = vector.load %arg5[%c0_21, %c17_22] : memref<4x290xf32, #tpu.memory_space<vmem>>, vector<4x256xf32>
    %c16_23 = arith.constant 16 : index
    %c0_24 = arith.constant 0 : index
    %29 = vector.load %arg6[%c16_23, %c0_24] : memref<36x256xf32, #tpu.memory_space<vmem>>, vector<4x256xf32>
    tpu.vector_store %arg6[%c16_23, %c0_24], %28 {strides = array<i32>} : memref<36x256xf32, #tpu.memory_space<vmem>>, vector<4x256xf32>,
    %c0_25 = arith.constant 0 : index
    %c18 = arith.constant 18 : index
    %30 = vector.load %arg5[%c0_25, %c18] : memref<4x290xf32, #tpu.memory_space<vmem>>, vector<4x256xf32>
    %cst_26 = arith.constant 0.000000e+00 : f32
    %31 = vector.broadcast %cst_26 : f32 to vector<4x256xf32>
    %32 = arith.select %13, %30, %31 : vector<4x256xi1>, vector<4x256xf32>
    %c20 = arith.constant 20 : index
    %c0_27 = arith.constant 0 : index
    %33 = vector.load %arg6[%c20, %c0_27] : memref<36x256xf32, #tpu.memory_space<vmem>>, vector<4x256xf32>
    tpu.vector_store %arg6[%c20, %c0_27], %32 {strides = array<i32>} : memref<36x256xf32, #tpu.memory_space<vmem>>, vector<4x256xf32>,
    %c0_28 = arith.constant 0 : index
    %c32 = arith.constant 32 : index
    %34 = vector.load %arg5[%c0_28, %c32] : memref<4x290xf32, #tpu.memory_space<vmem>>, vector<4x256xf32>
    %cst_29 = arith.constant 0.000000e+00 : f32
    %35 = vector.broadcast %cst_29 : f32 to vector<4x256xf32>
    %36 = arith.select %11, %34, %35 : vector<4x256xi1>, vector<4x256xf32>
    %c24 = arith.constant 24 : index
    %c0_30 = arith.constant 0 : index
    %37 = vector.load %arg6[%c24, %c0_30] : memref<36x256xf32, #tpu.memory_space<vmem>>, vector<4x256xf32>
    tpu.vector_store %arg6[%c24, %c0_30], %36 {strides = array<i32>} : memref<36x256xf32, #tpu.memory_space<vmem>>, vector<4x256xf32>,
    %c0_31 = arith.constant 0 : index
    %c33 = arith.constant 33 : index
    %38 = vector.load %arg5[%c0_31, %c33] : memref<4x290xf32, #tpu.memory_space<vmem>>, vector<4x256xf32>
    %c28 = arith.constant 28 : index
    %c0_32 = arith.constant 0 : index
    %39 = vector.load %arg6[%c28, %c0_32] : memref<36x256xf32, #tpu.memory_space<vmem>>, vector<4x256xf32>
    tpu.vector_store %arg6[%c28, %c0_32], %38 {strides = array<i32>} : memref<36x256xf32, #tpu.memory_space<vmem>>, vector<4x256xf32>,
    %c0_33 = arith.constant 0 : index
    %c34 = arith.constant 34 : index
    %40 = vector.load %arg5[%c0_33, %c34] : memref<4x290xf32, #tpu.memory_space<vmem>>, vector<4x256xf32>
    %cst_34 = arith.constant 0.000000e+00 : f32
    %41 = vector.broadcast %cst_34 : f32 to vector<4x256xf32>
    %42 = arith.select %13, %40, %41 : vector<4x256xi1>, vector<4x256xf32>
    %c32_35 = arith.constant 32 : index
    %c0_36 = arith.constant 0 : index
    %43 = vector.load %arg6[%c32_35, %c0_36] : memref<36x256xf32, #tpu.memory_space<vmem>>, vector<4x256xf32>
    tpu.vector_store %arg6[%c32_35, %c0_36], %42 {strides = array<i32>} : memref<36x256xf32, #tpu.memory_space<vmem>>, vector<4x256xf32>,
    %c0_37 = arith.constant 0 : index
    %c0_38 = arith.constant 0 : index
    %44 = vector.load %arg2[%c0_37, %c0_38] : memref<8x36xf32, #tpu.memory_space<vmem>>, vector<8x36xf32>
    %c0_39 = arith.constant 0 : index
    %c0_40 = arith.constant 0 : index
    %45 = vector.load %arg6[%c0_39, %c0_40] : memref<36x256xf32, #tpu.memory_space<vmem>>, vector<36x256xf32>
    %cst_41 = arith.constant dense<0.000000e+00> : vector<8x256xf32>
    %46 = tpu.matmul %44, %45, %cst_41 {dimension_numbers = #tpu.dot_dimension_numbers<[1], [0], [0], [1], [0, 0, 1, 1], [], []>} : vector<8x36xf32>, vector<36x256xf32>, vector<8x256xf32> -> vector<8x256xf32>
    %c0_42 = arith.constant 0 : index
    %c0_43 = arith.constant 0 : index
    %47 = vector.load %arg3[%c0_42, %c0_43] : memref<8x1xf32, #tpu.memory_space<vmem>>, vector<8x1xf32>
    %48 = vector.broadcast %47 : vector<8x1xf32> to vector<8x256xf32>
    %49 = arith.addf %46, %48 : vector<8x256xf32>
    %cst_44 = arith.constant 0.000000e+00 : f32
    %50 = vector.broadcast %cst_44 : f32 to vector<8x256xf32>
    %51 = arith.maximumf %49, %50 : vector<8x256xf32>
    %c0_45 = arith.constant 0 : index
    %c0_46 = arith.constant 0 : index
    %c0_47 = arith.constant 0 : index
    %52 = vector.load %arg4[%c0_45, %c0_46, %c0_47] : memref<1x8x256xf32, #tpu.memory_space<vmem>>, vector<1x8x256xf32>
    %53 = vector.shape_cast %52 : vector<1x8x256xf32> to vector<8x256xf32>
    %54 = vector.shape_cast %51 : vector<8x256xf32> to vector<1x8x256xf32>
    tpu.vector_store %arg4[%c0_45, %c0_46, %c0_47], %54 {strides = array<i32>} : memref<1x8x256xf32, #tpu.memory_space<vmem>>, vector<1x8x256xf32>,
    return
  }
  func.func @transform_0(%arg0: i32) -> (i32, i32, i32) {
    %c0_i32 = arith.constant 0 : i32
    %c0_i32_0 = arith.constant 0 : i32
    %c0_i32_1 = arith.constant 0 : i32
    return %arg0, %c0_i32, %c0_i32_0 : i32, i32, i32
  }
  func.func @transform_1(%arg0: i32) -> (i32, i32) {
    %c0_i32 = arith.constant 0 : i32
    %c0_i32_0 = arith.constant 0 : i32
    %c0_i32_1 = arith.constant 0 : i32
    return %c0_i32, %c0_i32_0 : i32, i32
  }
  func.func @transform_2(%arg0: i32) -> (i32, i32) {
    %c0_i32 = arith.constant 0 : i32
    %c0_i32_0 = arith.constant 0 : i32
    %c0_i32_1 = arith.constant 0 : i32
    return %c0_i32, %c0_i32_0 : i32, i32
  }
  func.func @transform_3(%arg0: i32) -> (i32, i32, i32) {
    %c0_i32 = arith.constant 0 : i32
    %c0_i32_0 = arith.constant 0 : i32
    %c0_i32_1 = arith.constant 0 : i32
    return %arg0, %c0_i32, %c0_i32_0 : i32, i32, i32
  }
}

</mosaic_0001>

<llo_original>
// kernel: tpu_custom_call.1
$region0: #{tpu_custom_call.1}
  #allocation0 [shape = 'u32[]', space=smem, size = 0x4, offset = 0x4, fixed_abs, tag = 'smem constant byte address 0x4 - core index']
  #allocation1 [shape = 'u32[72,128]{1,0:T(1,128)}', space=vmem, size = 0x9000, scoped, tag = 'internal scratch']
  #allocation2 [shape = 'f32[4,290]{1,0:T(4,128)}', space=vmem, size = 0x1800, scoped, tag = 'scratch operand']
  #allocation3 [shape = 'f32[36,256]{1,0:T(8,128)}', space=vmem, size = 0xa000, scoped, tag = 'scratch operand']
  %s0 = inlined_call_operand.hbm [shape: f32[2,4,256], index: 0, kind: input, shape index: {}]
  %s1 = inlined_call_operand.vmem [shape: f32[8,36], index: 1, kind: input, shape index: {}]
  %s2 = inlined_call_operand.vmem [shape: f32[8,1], index: 2, kind: input, shape index: {}]
  %s3 = inlined_call_operand.hbm [shape: f32[2,8,256], index: 3, kind: output, shape index: {}]
  %s4 = sld [smem:[#allocation0]]
  $region49: #{tpu_custom_call.1} parent=0
    _
  %s6 = ssub.s32 1, %s4
  %s7 = scalar_select 0, %s6, %s4
  $region1: #{tpu_custom_call.1} parent=0
    #allocation4 [shape = 'u8[8192]{0}', space=vmem, size = 0x2000, scoped, tag = 'input window, operand 0']
    #allocation5 [shape = 's32[2]{0}', space=sflag, size = 0x8, scoped, tag = 'scoped memory for tpu_custom_call.1']
    #allocation6 [shape = 's32[2]{0}', space=sflag, size = 0x8, scoped, tag = 'scoped memory for tpu_custom_call.1']
    #allocation7 [shape = 'u8[16384]{0}', space=vmem, size = 0x4000, scoped, tag = 'output window, operand 0']
    %8 = vsyncpa [#allocation5], 0
    %s9 = scalar_lea.sflag [#allocation5], 1
    %10 = vsyncpa %s9, 0
    %11 = vsyncpa [#allocation6], 0
    %s12 = scalar_lea.sflag [#allocation6], 1
    %13 = vsyncpa %s12, 0
    loop: start=0, step=1, limit=4
    $region2: #{tpu_custom_call.1} parent=1 // loop_pre_header
      _
    $region3: #{tpu_custom_call.1} parent=1 // loop_header
      %s15 = sphi 0, %s19
      %p16 = scmp.ge.s32.totalorder %s15, 4
      %s25 = sphi 0, %s27
      %s28 = sphi 0, %s25
      %s29 = sphi 0, %s28
      %s45 = sphi 0, %s29
      %s49 = sphi 0, %s49
      %s51 = sphi 0, %s49
      %s52 = sphi 0, %s51
      %s66 = sphi 0, %s52
      %s70 = sphi 0, %s70
      %s72 = sphi 0, %s70
      %s73 = sphi 0, %s72
      %s87 = sphi 0, %s73
      %s93 = sphi 0, %s95
      %s96 = sphi 0, %s93
      %s97 = sphi 0, %s96
      %s113 = sphi 0, %s97
    $region4: #{tpu_custom_call.1} parent=1 // loop_header_branch
      %18 = sbr.rel (%p16) target = $region8
    $region5: #{tpu_custom_call.1} parent=1 // loop_body
      %s20 = ssub.s32 %s15, 1
      %s21 = ssub.s32 %s15, 2
      %s22 = sadd.s32 %s15, 1
      %s23 = ssub.s32 %s15, %s22
      %p24 = scmp.eq.s32.totalorder %s23, 0
      %s26 = sadd.s32 %s25, 1
      %s27 = scalar_select %p24, %s25, %s26
      %p30 = pneg %p24
      %p31 = scmp.eq.s32.totalorder %s15, 1
      %p32 = por %p30, %p31
      %p33 = scmp.ne.s32.totalorder %s25, %s28
      %p34 = scmp.eq.s32.totalorder %s15, 0
      %p35 = por %p33, %p34
      %p36 = scmp.ne.s32.totalorder %s25, %s28
      %p37 = scmp.eq.s32.totalorder %s20, 1
      %p38 = por %p36, %p37
      %p39 = scmp.ne.s32.totalorder %s28, %s29
      %p40 = scmp.eq.s32.totalorder %s20, 0
      %p41 = por %p39, %p40
      %p42 = scmp.ne.s32.totalorder %s28, %s29
      %p43 = scmp.eq.s32.totalorder %s21, 1
      %p44 = por %p42, %p43
      %p46 = scmp.ne.s32.totalorder %s29, %s45
      %p47 = scmp.eq.s32.totalorder %s21, 0
      %p48 = por %p46, %p47
      %s50 = sadd.s32 %s49, 1
      %p53 = scmp.eq.s32.totalorder %s15, 1
      %p54 = scmp.ne.s32.totalorder %s49, %s51
      %p55 = scmp.eq.s32.totalorder %s15, 0
      %p56 = por %p54, %p55
      %p57 = scmp.ne.s32.totalorder %s49, %s51
      %p58 = scmp.eq.s32.totalorder %s20, 1
      %p59 = por %p57, %p58
      %p60 = scmp.ne.s32.totalorder %s51, %s52
      %p61 = scmp.eq.s32.totalorder %s20, 0
      %p62 = por %p60, %p61
      %p63 = scmp.ne.s32.totalorder %s51, %s52
      %p64 = scmp.eq.s32.totalorder %s21, 1
      %p65 = por %p63, %p64
      %p67 = scmp.ne.s32.totalorder %s52, %s66
      %p68 = scmp.eq.s32.totalorder %s21, 0
      %p69 = por %p67, %p68
      %s71 = sadd.s32 %s70, 1
      %p74 = scmp.eq.s32.totalorder %s15, 1
      %p75 = scmp.ne.s32.totalorder %s70, %s72
      %p76 = scmp.eq.s32.totalorder %s15, 0
      %p77 = por %p75, %p76
      %p78 = scmp.ne.s32.totalorder %s70, %s72
      %p79 = scmp.eq.s32.totalorder %s20, 1
      %p80 = por %p78, %p79
      %p81 = scmp.ne.s32.totalorder %s72, %s73
      %p82 = scmp.eq.s32.totalorder %s20, 0
      %p83 = por %p81, %p82
      %p84 = scmp.ne.s32.totalorder %s72, %s73
      %p85 = scmp.eq.s32.totalorder %s21, 1
      %p86 = por %p84, %p85
      %p88 = scmp.ne.s32.totalorder %s73, %s87
      %p89 = scmp.eq.s32.totalorder %s21, 0
      %p90 = por %p88, %p89
      %s91 = ssub.s32 %s15, %s22
      %p92 = scmp.eq.s32.totalorder %s91, 0
      %s94 = sadd.s32 %s93, 1
      %s95 = scalar_select %p92, %s93, %s94
      %p98 = pneg %p92
      %p99 = scmp.eq.s32.totalorder %s15, 1
      %p100 = por %p98, %p99
      %p101 = scmp.ne.s32.totalorder %s93, %s96
      %p102 = scmp.eq.s32.totalorder %s15, 0
      %p103 = por %p101, %p102
      %p104 = scmp.ne.s32.totalorder %s93, %s96
      %p105 = scmp.eq.s32.totalorder %s20, 1
      %p106 = por %p104, %p105
      %p107 = scmp.ne.s32.totalorder %s96, %s97
      %p108 = scmp.eq.s32.totalorder %s20, 0
      %p109 = por %p107, %p108
      %p110 = scmp.ne.s32.totalorder %s96, %s97
      %p111 = scmp.eq.s32.totalorder %s21, 1
      %p112 = por %p110, %p111
      %p114 = scmp.ne.s32.totalorder %s97, %s113
      %p115 = scmp.eq.s32.totalorder %s21, 0
      %p116 = por %p114, %p115
      %p117 = scmp.le.s32.totalorder 1, %s15
      %p118 = scmp.lt.s32.totalorder %s15, 3
      %p119 = pnand %p117, %p118
      %p120 = pneg %p119
      // Predicated region
      $region9: #{tpu_custom_call.1} parent=5 // pred_check
        _
      $region10: #{tpu_custom_call.1} parent=5 // pred_check_branch
        %122 = sbr.rel (%p119) target = $region12
      $region11: #{tpu_custom_call.1} parent=5 // pred_region
        %s123 = ssub.s32 %s15, 1
        // Predicated region
        $region13: #{tpu_custom_call.1} parent=11 // pred_check
          %p124 = pneg %p62
        $region14: #{tpu_custom_call.1} parent=11 // pred_check_branch
          %126 = sbr.rel (%p124) target = $region16
        $region15: #{tpu_custom_call.1} parent=11 // pred_region
          _
        $region16: #{tpu_custom_call.1} parent=11 // pred_fallthru
          _
        // Predicated region
        $region17: #{tpu_custom_call.1} parent=11 // pred_check
          %p127 = pneg %p83
        $region18: #{tpu_custom_call.1} parent=11 // pred_check_branch
          %129 = sbr.rel (%p127) target = $region20
        $region19: #{tpu_custom_call.1} parent=11 // pred_region
          _
        $region20: #{tpu_custom_call.1} parent=11 // pred_fallthru
          _
      $region12: #{tpu_custom_call.1} parent=5 // pred_fallthru
        _
      %p130 = scmp.lt.s32.totalorder %s15, 2
      // Predicated region
      $region21: #{tpu_custom_call.1} parent=5 // pred_check
        %p131 = pneg %p130
      $region22: #{tpu_custom_call.1} parent=5 // pred_check_branch
        %133 = sbr.rel (%p131) target = $region24
      $region23: #{tpu_custom_call.1} parent=5 // pred_region
        // Predicated region
        $region25: #{tpu_custom_call.1} parent=23 // pred_check
          %p134 = pneg %p35
        $region26: #{tpu_custom_call.1} parent=23 // pred_check_branch
          %136 = sbr.rel (%p134) target = $region28
        $region27: #{tpu_custom_call.1} parent=23 // pred_region
          %s137 = sand.u32 %s25, 1
          %s138 = scalar_lea.sflag [#allocation5], %s137
          %s139 = sand.u32 %s25, 1
          %s140 = smul.addr %s139, 8
          %s141 = scalar_lea.vmem [#allocation4], %s140
          %143 = vsyncadd %s138, 0
          %s144 = smul.addr %s15, 2
          %s145 = smul.addr %s144, 4
          %s146 = scalar_lea.hbm %s0, %s145
          %s148 = sshll.u32 %s146, 4
          %s149 = int_to_ptr.hbm [resolvable:$true] %s148
          %s150 = sshll.u32 %s141, 4
          %s151 = int_to_ptr.vmem [resolvable:$true] %s150
          %153 = dma.hbm_to_vmem [thread:$0]  %s149, 128, %s151, %s138
        $region28: #{tpu_custom_call.1} parent=23 // pred_fallthru
          _
      $region24: #{tpu_custom_call.1} parent=5 // pred_fallthru
        _
      %p154 = scmp.le.s32.totalorder 1, %s15
      %p155 = scmp.lt.s32.totalorder %s15, 3
      %p156 = pnand %p154, %p155
      %p157 = pneg %p156
      // Predicated region
      $region29: #{tpu_custom_call.1} parent=5 // pred_check
        _
      $region30: #{tpu_custom_call.1} parent=5 // pred_check_branch
        %159 = sbr.rel (%p156) target = $region32
      $region31: #{tpu_custom_call.1} parent=5 // pred_region
        %s160 = ssub.s32 %s15, 1
        %s161 = sand.u32 %s28, 1
        %s162 = scalar_lea.sflag [#allocation5], %s161
        %s163 = sand.u32 %s28, 1
        %s164 = smul.addr %s163, 8
        %s165 = scalar_lea.vmem [#allocation4], %s164
        // Predicated region
        $region33: #{tpu_custom_call.1} parent=31 // pred_check
          %p166 = pneg %p41
        $region34: #{tpu_custom_call.1} parent=31 // pred_check_branch
          %168 = sbr.rel (%p166) target = $region36
        $region35: #{tpu_custom_call.1} parent=31 // pred_region
          %170 = dma.done %s162, 128
        $region36: #{tpu_custom_call.1} parent=31 // pred_fallthru
          _
        %s171 = sand.u32 %s28, 1
        %s172 = scalar_lea.sflag [#allocation5], %s171
        %s173 = sand.u32 %s28, 1
        %s174 = smul.addr %s173, 8
        %s175 = scalar_lea.vmem [#allocation4], %s174
        %p176 = pneg %p41
        %p177 = pneg %p38
        %p178 = pneg %p62
        %p179 = pneg %p59
        %p180 = pneg %p83
        %p181 = pneg %p80
        %p182 = pneg %p109
        %p183 = pneg %p106
        %s184 = sand.u32 %s96, 1
        %s185 = scalar_lea.sflag [#allocation6], %s184
        %s186 = sand.u32 %s96, 1
        %s187 = smul.addr %s186, 16
        %s188 = scalar_lea.vmem [#allocation7], %s187
        %vm189 = vcmask 134144
        %190 = vst.msk [vmem:[#allocation2] sm:$0xf] %vm189, 0.0
        %vm191 = vcmask 273544
        %192 = vst.msk [vmem:[#allocation2 + $0x8] sm:$0xf] %vm191, 0.0
        %v193 = vld [vmem:[%s165] sm:$0xff]
        %195 = vrot.lane.b32.xlu0 %v193, 17
        %v196 = vpop.permute.xlu0 %195
        %v197 = vrot.slane %v196, 4
        %vm198 = vcmask 138240
        %v199 = vsel %vm198, %v197, %v196
        %vm202 = vcmask 1043592
        %vm203 = vcmask 1047556
        %vm204 = vmor %vm203, %vm202
        %205 = vst.msk [vmem:[#allocation2] sm:$0xff] %vm204, %v199
        %206 = vst.msk [vmem:[#allocation2 + $0x8] sm:$0xf] %vm189, %v197
        %v207 = vlaneseq
        %v208 = vand.u32 %v207, 127
        %v209 = vadd.s32 %v208, 128
        %v210 = vand.u32 %v208, 15
        %v211 = vand.u32 %v209, 15
        %vm212 = vcmp.ne.s32.totalorder %v210, 0
        %vm213 = vcmp.ne.s32.totalorder %v211, 0
        %vm214 = vcmp.ne.s32.totalorder %v210, 15
        %vm215 = vcmp.ne.s32.totalorder %v211, 15
        %v216 = vld [vmem:[#allocation2] sm:$0xff]
        %218 = vst [vmem:[#allocation1] ss:$2 sm:$0xff] %v216
        %v219 = vld.sshfl [vmem:[#allocation1] sm:$0xff pattern:$0x75316420]
        %v220 = vld.sshfl [vmem:[#allocation1 + $0x8] sm:$0xff pattern:$0x75316420]
        %v223 = vsel %vm212, %v219, 0.0
        %v224 = vsel %vm213, %v220, 0.0
        %225 = vst [vmem:[#allocation3] sm:$0xf] %v223
        %226 = vst [vmem:[#allocation3 + $0x8] sm:$0xf] %v224
        %v227 = vld [vmem:[#allocation2] sm:$0xff]
        %v228 = vld [vmem:[#allocation2 + $0x8] sm:$0xf]
        %s231 = scalar_lea.vmem [#allocation1], 1
        %232 = vst [vmem:[%s231] ss:$2 sm:$0xff] %v227
        %s233 = scalar_lea.vmem [#allocation1], 17
        %234 = vst [vmem:[%s233] ss:$2 sm:$0xff] %v228
        %v235 = vld.sshfl [vmem:[#allocation1] sm:$0xff pattern:$0x75316420]
        %v236 = vld.sshfl [vmem:[#allocation1 + $0x8] sm:$0xff pattern:$0x75316420]
        %v237 = vld.sshfl [vmem:[#allocation1 + $0x10] sm:$0xff pattern:$0x75316420]
        %238 = vrot.lane.b32.xlu0 %v235, 127
        %v239 = vpop.permute.xlu0 %238
        %240 = vrot.lane.b32.xlu0 %v236, 127
        %v241 = vpop.permute.xlu0 %240
        %242 = vrot.lane.b32.xlu0 %v237, 127
        %v243 = vpop.permute.xlu0 %242
        %vm244 = vcmask 1039360
        %v245 = vsel %vm244, %v239, %v241
        %v246 = vsel %vm244, %v241, %v243
        %249 = vst [vmem:[#allocation3] sm:$0xf0] %v245
        %250 = vst [vmem:[#allocation3 + $0x8] sm:$0xf0] %v246
        %v251 = vld [vmem:[#allocation2] sm:$0xff]
        %v252 = vld [vmem:[#allocation2 + $0x8] sm:$0xf]
        %255 = vst [vmem:[#allocation1] ss:$2 sm:$0xff] %v251
        %s256 = scalar_lea.vmem [#allocation1], 16
        %257 = vst [vmem:[%s256] ss:$2 sm:$0xff] %v252
        %v258 = vld.sshfl [vmem:[#allocation1] sm:$0xff pattern:$0x75316420]
        %v259 = vld.sshfl [vmem:[#allocation1 + $0x8] sm:$0xff pattern:$0x75316420]
        %v260 = vld.sshfl [vmem:[#allocation1 + $0x10] sm:$0xff pattern:$0x75316420]
        %261 = vrot.lane.b32.xlu0 %v258, 126
        %v262 = vpop.permute.xlu0 %261
        %263 = vrot.lane.b32.xlu0 %v259, 126
        %v264 = vpop.permute.xlu0 %263
        %265 = vrot.lane.b32.xlu0 %v260, 126
        %v266 = vpop.permute.xlu0 %265
        %vm267 = vcmask 1031168
        %v268 = vsel %vm267, %v262, %v264
        %v269 = vsel %vm267, %v264, %v266
        %v272 = vsel %vm214, %v268, 0.0
        %v273 = vsel %vm215, %v269, 0.0
        %274 = vst [vmem:[#allocation3 + $0x10] sm:$0xf] %v272
        %275 = vst [vmem:[#allocation3 + $0x18] sm:$0xf] %v273
        %v276 = vld [vmem:[#allocation2] sm:$0xff]
        %v277 = vld [vmem:[#allocation2 + $0x8] sm:$0xf]
        %280 = vst [vmem:[#allocation1] ss:$2 sm:$0xff] %v276
        %s281 = scalar_lea.vmem [#allocation1], 16
        %282 = vst [vmem:[%s281] ss:$2 sm:$0xff] %v277
        %v283 = vld.sshfl [vmem:[#allocation1] sm:$0xff pattern:$0x75316420]
        %v284 = vld.sshfl [vmem:[#allocation1 + $0x8] sm:$0xff pattern:$0x75316420]
        %v285 = vld.sshfl [vmem:[#allocation1 + $0x10] sm:$0xff pattern:$0x75316420]
        %286 = vrot.lane.b32.xlu0 %v283, 112
        %v287 = vpop.permute.xlu0 %286
        %288 = vrot.lane.b32.xlu0 %v284, 112
        %v289 = vpop.permute.xlu0 %288
        %290 = vrot.lane.b32.xlu0 %v285, 112
        %v291 = vpop.permute.xlu0 %290
        %vm292 = vcmask 916480
        %v293 = vsel %vm292, %v287, %v289
        %v294 = vsel %vm292, %v289, %v291
        %v297 = vsel %vm212, %v293, 0.0
        %v298 = vsel %vm213, %v294, 0.0
        %v301 = vrot.slane %v297, 4
        %v302 = vrot.slane %v298, 4
        %305 = vst [vmem:[#allocation3 + $0x10] sm:$0xf0] %v301
        %306 = vst [vmem:[#allocation3 + $0x18] sm:$0xf0] %v302
        %v307 = vld [vmem:[#allocation2] sm:$0xff]
        %v308 = vld [vmem:[#allocation2 + $0x8] sm:$0xf]
        %311 = vst [vmem:[#allocation1] ss:$2 sm:$0xff] %v307
        %s312 = scalar_lea.vmem [#allocation1], 16
        %313 = vst [vmem:[%s312] ss:$2 sm:$0xff] %v308
        %v314 = vld.sshfl [vmem:[#allocation1] sm:$0xff pattern:$0x75316420]
        %v315 = vld.sshfl [vmem:[#allocation1 + $0x8] sm:$0xff pattern:$0x75316420]
        %v316 = vld.sshfl [vmem:[#allocation1 + $0x10] sm:$0xff pattern:$0x75316420]
        %317 = vrot.lane.b32.xlu0 %v314, 111
        %v318 = vpop.permute.xlu0 %317
        %319 = vrot.lane.b32.xlu0 %v315, 111
        %v320 = vpop.permute.xlu0 %319
        %321 = vrot.lane.b32.xlu0 %v316, 111
        %v322 = vpop.permute.xlu0 %321
        %vm323 = vcmask 908288
        %v324 = vsel %vm323, %v318, %v320
        %v325 = vsel %vm323, %v320, %v322
        %328 = vst [vmem:[#allocation3 + $0x20] sm:$0xf] %v324
        %329 = vst [vmem:[#allocation3 + $0x28] sm:$0xf] %v325
        %v330 = vld [vmem:[#allocation2] sm:$0xff]
        %v331 = vld [vmem:[#allocation2 + $0x8] sm:$0xf]
        %334 = vst [vmem:[#allocation1] ss:$2 sm:$0xff] %v330
        %s335 = scalar_lea.vmem [#allocation1], 16
        %336 = vst [vmem:[%s335] ss:$2 sm:$0xff] %v331
        %v337 = vld.sshfl [vmem:[#allocation1] sm:$0xff pattern:$0x75316420]
        %v338 = vld.sshfl [vmem:[#allocation1 + $0x8] sm:$0xff pattern:$0x75316420]
        %v339 = vld.sshfl [vmem:[#allocation1 + $0x10] sm:$0xff pattern:$0x75316420]
        %340 = vrot.lane.b32.xlu0 %v337, 110
        %v341 = vpop.permute.xlu0 %340
        %342 = vrot.lane.b32.xlu0 %v338, 110
        %v343 = vpop.permute.xlu0 %342
        %344 = vrot.lane.b32.xlu0 %v339, 110
        %v345 = vpop.permute.xlu0 %344
        %vm346 = vcmask 900096
        %v347 = vsel %vm346, %v341, %v343
        %v348 = vsel %vm346, %v343, %v345
        %v351 = vsel %vm214, %v347, 0.0
        %v352 = vsel %vm215, %v348, 0.0
        %v355 = vrot.slane %v351, 4
        %v356 = vrot.slane %v352, 4
        %359 = vst [vmem:[#allocation3 + $0x20] sm:$0xf0] %v355
        %360 = vst [vmem:[#allocation3 + $0x28] sm:$0xf0] %v356
        %v361 = vld [vmem:[#allocation2] sm:$0xff]
        %v362 = vld [vmem:[#allocation2 + $0x8] sm:$0xf]
        %365 = vst [vmem:[#allocation1] ss:$2 sm:$0xff] %v361
        %s366 = scalar_lea.vmem [#allocation1], 16
        %367 = vst [vmem:[%s366] ss:$2 sm:$0xff] %v362
        %v368 = vld.sshfl [vmem:[#allocation1] sm:$0xff pattern:$0x75316420]
        %v369 = vld.sshfl [vmem:[#allocation1 + $0x8] sm:$0xff pattern:$0x75316420]
        %v370 = vld.sshfl [vmem:[#allocation1 + $0x10] sm:$0xff pattern:$0x75316420]
        %371 = vrot.lane.b32.xlu0 %v368, 96
        %v372 = vpop.permute.xlu0 %371
        %373 = vrot.lane.b32.xlu0 %v369, 96
        %v374 = vpop.permute.xlu0 %373
        %375 = vrot.lane.b32.xlu0 %v370, 96
        %v376 = vpop.permute.xlu0 %375
        %vm377 = vcmask 785408
        %v378 = vsel %vm377, %v372, %v374
        %v379 = vsel %vm377, %v374, %v376
        %v382 = vsel %vm212, %v378, 0.0
        %v383 = vsel %vm213, %v379, 0.0
        %384 = vst [vmem:[#allocation3 + $0x30] sm:$0xf] %v382
        %385 = vst [vmem:[#allocation3 + $0x38] sm:$0xf] %v383
        %v386 = vld [vmem:[#allocation2] sm:$0xff]
        %v387 = vld [vmem:[#allocation2 + $0x8] sm:$0xf]
        %s390 = scalar_lea.vmem [#allocation1], 1
        %391 = vst [vmem:[%s390] ss:$2 sm:$0xff] %v386
        %s392 = scalar_lea.vmem [#allocation1], 17
        %393 = vst [vmem:[%s392] ss:$2 sm:$0xff] %v387
        %v394 = vld.sshfl [vmem:[#allocation1] sm:$0xff pattern:$0x75316420]
        %v395 = vld.sshfl [vmem:[#allocation1 + $0x8] sm:$0xff pattern:$0x75316420]
        %v396 = vld.sshfl [vmem:[#allocation1 + $0x10] sm:$0xff pattern:$0x75316420]
        %397 = vrot.lane.b32.xlu0 %v394, 95
        %v398 = vpop.permute.xlu0 %397
        %399 = vrot.lane.b32.xlu0 %v395, 95
        %v400 = vpop.permute.xlu0 %399
        %401 = vrot.lane.b32.xlu0 %v396, 95
        %v402 = vpop.permute.xlu0 %401
        %vm403 = vcmask 777216
        %v404 = vsel %vm403, %v398, %v400
        %v405 = vsel %vm403, %v400, %v402
        %408 = vst [vmem:[#allocation3 + $0x30] sm:$0xf0] %v404
        %409 = vst [vmem:[#allocation3 + $0x38] sm:$0xf0] %v405
        %v410 = vld [vmem:[#allocation2] sm:$0xff]
        %v411 = vld [vmem:[#allocation2 + $0x8] sm:$0xf]
        %414 = vst [vmem:[#allocation1] ss:$2 sm:$0xff] %v410
        %s415 = scalar_lea.vmem [#allocation1], 16
        %416 = vst [vmem:[%s415] ss:$2 sm:$0xff] %v411
        %v417 = vld.sshfl [vmem:[#allocation1] sm:$0xff pattern:$0x75316420]
        %v418 = vld.sshfl [vmem:[#allocation1 + $0x8] sm:$0xff pattern:$0x75316420]
        %v419 = vld.sshfl [vmem:[#allocation1 + $0x10] sm:$0xff pattern:$0x75316420]
        %420 = vrot.lane.b32.xlu0 %v417, 94
        %v421 = vpop.permute.xlu0 %420
        %422 = vrot.lane.b32.xlu0 %v418, 94
        %v423 = vpop.permute.xlu0 %422
        %424 = vrot.lane.b32.xlu0 %v419, 94
        %v425 = vpop.permute.xlu0 %424
        %vm426 = vcmask 769024
        %v427 = vsel %vm426, %v421, %v423
        %v428 = vsel %vm426, %v423, %v425
        %v431 = vsel %vm214, %v427, 0.0
        %v432 = vsel %vm215, %v428, 0.0
        %433 = vst [vmem:[#allocation3 + $0x40] sm:$0xf] %v431
        %434 = vst [vmem:[#allocation3 + $0x48] sm:$0xf] %v432
        %v435 = vld [vmem:[%s1] sm:$0xff]
        %v436 = vld [vmem:[#allocation3] sm:$0xff]
        %v437 = vld [vmem:[#allocation3 + $0x8] sm:$0xff]
        %v438 = vld [vmem:[#allocation3 + $0x10] sm:$0xff]
        %v439 = vld [vmem:[#allocation3 + $0x18] sm:$0xff]
        %v440 = vld [vmem:[#allocation3 + $0x20] sm:$0xff]
        %v441 = vld [vmem:[#allocation3 + $0x28] sm:$0xff]
        %v442 = vld [vmem:[#allocation3 + $0x30] sm:$0xff]
        %v443 = vld [vmem:[#allocation3 + $0x38] sm:$0xff]
        %v444 = vld [vmem:[#allocation3 + $0x40] sm:$0xf]
        %v445 = vld [vmem:[#allocation3 + $0x48] sm:$0xf]
        %v446 = vld [vmem:[%s2] sm:$0xff]
        %448 = vset.pattern.permute.xlu0 0
        %449 = vperm.xlu0 %448, %v446
        %v450 = vpop.permute.xlu0 %449
        %vm452 = vcmask 293888
        %v454 = vsel %vm452, %v435, 0
        %vm456 = vcmask 1043456
        %v458 = vsel %vm456, %v444, 0
        %v461 = vsel %vm456, %v445, 0
        %463 = vmatpush.msra.mxu0 0.0
        %464 = vmatpush.msra.mxu0 0.0
        %465 = vmatpush.msra.mxu0 0.0
        %466 = vmatpush.msra.mxu0 0.0
        %467 = vmatpush.msra.mxu0 0.0
        %468 = vmatpush.msra.mxu0 0.0
        %469 = vmatpush.msra.mxu0 0.0
        %470 = vmatpush.msra.mxu0 0.0
        %471 = vmatpush.msra.mxu0 0.0
        %472 = vmatpush.msra.mxu0 0.0
        %473 = vmatpush.msra.mxu0 0.0
        %474 = vmatpush.msra.mxu0 %v458
        %475 = vmatpush.msra.mxu0 %v442
        %476 = vmatpush.msra.mxu0 %v440
        %477 = vmatpush.msra.mxu0 %v438
        %478 = vmatpush.msra.mxu0 %v436
        %479 = vmatmul.f32.gmra.mxu0 %v454
        %v480 = vpop.f32.mrf.mxu0
        %v481 = vadd.f32 %v450, %v480
        %482 = vdwg.mxu0
        %483 = vmatpush.msra.mxu0 0.0
        %484 = vmatpush.msra.mxu0 0.0
        %485 = vmatpush.msra.mxu0 0.0
        %486 = vmatpush.msra.mxu0 0.0
        %487 = vmatpush.msra.mxu0 0.0
        %488 = vmatpush.msra.mxu0 0.0
        %489 = vmatpush.msra.mxu0 0.0
        %490 = vmatpush.msra.mxu0 0.0
        %491 = vmatpush.msra.mxu0 0.0
        %492 = vmatpush.msra.mxu0 0.0
        %493 = vmatpush.msra.mxu0 0.0
        %494 = vmatpush.msra.mxu0 %v461
        %495 = vmatpush.msra.mxu0 %v443
        %496 = vmatpush.msra.mxu0 %v441
        %497 = vmatpush.msra.mxu0 %v439
        %498 = vmatpush.msra.mxu0 %v437
        %499 = vmatmul.f32.gmra.mxu0 %v454
        %v500 = vpop.f32.mrf.mxu0
        %v501 = vadd.f32 %v450, %v500
        %502 = vdwg.mxu0
        %v503 = vmax.f32 %v481, 0.0
        %v504 = vmax.f32 %v501, 0.0
        %505 = vst [vmem:[%s188] sm:$0xff] %v503
        %506 = vst [vmem:[%s188 + $0x8] sm:$0xff] %v504
        %s507 = sand.u32 %s96, 1
        %s508 = scalar_lea.sflag [#allocation6], %s507
        %s509 = sand.u32 %s96, 1
        %s510 = smul.addr %s509, 16
        %s511 = scalar_lea.vmem [#allocation7], %s510
        // Predicated region
        $region37: #{tpu_custom_call.1} parent=31 // pred_check
          %p512 = pneg %p106
        $region38: #{tpu_custom_call.1} parent=31 // pred_check_branch
          %514 = sbr.rel (%p512) target = $region40
        $region39: #{tpu_custom_call.1} parent=31 // pred_region
          %516 = vsyncadd %s508, 0
          %s517 = smul.addr %s20, 2
          %s518 = smul.addr %s517, 8
          %s519 = scalar_lea.hbm %s3, %s518
          %s521 = sshll.u32 %s511, 4
          %s522 = int_to_ptr.vmem [resolvable:$true] %s521
          %s523 = sshll.u32 %s519, 4
          %s524 = int_to_ptr.hbm [resolvable:$true] %s523
          %526 = dma.vmem_to_hbm [thread:$0]  %s522, 256, %s524, %s508
        $region40: #{tpu_custom_call.1} parent=31 // pred_fallthru
          _
      $region32: #{tpu_custom_call.1} parent=5 // pred_fallthru
        _
      %p527 = scmp.le.s32.totalorder 2, %s15
      // Predicated region
      $region41: #{tpu_custom_call.1} parent=5 // pred_check
        %p528 = pneg %p527
      $region42: #{tpu_custom_call.1} parent=5 // pred_check_branch
        %530 = sbr.rel (%p528) target = $region44
      $region43: #{tpu_custom_call.1} parent=5 // pred_region
        %s531 = ssub.s32 %s15, 2
        // Predicated region
        $region45: #{tpu_custom_call.1} parent=43 // pred_check
          %p532 = pneg %p112
        $region46: #{tpu_custom_call.1} parent=43 // pred_check_branch
          %534 = sbr.rel (%p532) target = $region48
        $region47: #{tpu_custom_call.1} parent=43 // pred_region
          %s535 = sand.u32 %s97, 1
          %s536 = scalar_lea.sflag [#allocation6], %s535
          %s537 = sand.u32 %s97, 1
          %s538 = smul.addr %s537, 16
          %s539 = scalar_lea.vmem [#allocation7], %s538
          %541 = dma.done %s536, 256
        $region48: #{tpu_custom_call.1} parent=43 // pred_fallthru
          _
      $region44: #{tpu_custom_call.1} parent=5 // pred_fallthru
        _
    $region6: #{tpu_custom_call.1} parent=1 // loop_footer
      %s19 = sadd.s32 1, %s15
    $region7: #{tpu_custom_call.1} parent=1 // loop_footer_branch
      %14 = sbr.rel target = $region3
    $region8: #{tpu_custom_call.1} parent=1 // loop_exit
      _
    %542 = vsyncpa [#allocation5], 1
    %s543 = scalar_lea.sflag [#allocation5], 1
    %544 = vsyncpa %s543, 1
    %545 = vsyncpa [#allocation6], 1
    %s546 = scalar_lea.sflag [#allocation6], 1
    %547 = vsyncpa %s546, 1

</llo_original>
